<compile_context>
chip_gen: v6e
topology: v6e:2x2x1
jax: 0.10.0
libtpu: 0.0.40
codegen_flags: <defaults>
</compile_context>

<pallas_src>
import functools

import jax
import jax.numpy as jnp
import numpy as np
from jax import lax
from jax.experimental import pallas as pl
from jax.experimental.pallas import tpu as pltpu

LEAKY = 0.1     # LeakyReLU negative slope used by the module
EPS = 1e-5      # nn.BatchNorm2d default eps


def _leaky(x):
    # LeakyReLU(0.1): slope < 1, so max(x, 0.1*x) == where(x > 0, x, 0.1*x)
    return jnp.maximum(x, LEAKY * x)


# ---------------------------------------------------------------------------
# One-time probe of pltpu.roll's lane-rotation direction.  This lets the main
# kernel commit to a single shift direction per 3x3 tap (half the VALU work of
# a direction-agnostic dual-mask scheme) while staying correct regardless of
# the backend's rotation convention.
# ---------------------------------------------------------------------------
_ROLL_LIKE_JNP = None


def _roll_matches_jnp():
    """True iff pltpu.roll(x, s, axis)[..., i] == x[..., (i - s) % n]."""
    global _ROLL_LIKE_JNP
    if _ROLL_LIKE_JNP is None:
        n = 256

        def probe(x_ref, o_ref):
            o_ref[...] = pltpu.roll(x_ref[...], 1, axis=1)

        x = jnp.tile(jnp.arange(n, dtype=jnp.int32)[None, :], (2, 1))
        row = np.asarray(
            pl.pallas_call(
                probe, out_shape=jax.ShapeDtypeStruct((2, n), jnp.int32))(x))[0]
        base = np.arange(n)
        if np.array_equal(row, np.roll(base, 1)):
            _ROLL_LIKE_JNP = True
        elif np.array_equal(row, np.roll(base, -1)):
            _ROLL_LIKE_JNP = False
        else:
            raise NotImplementedError("unexpected pltpu.roll lane semantics")
    return _ROLL_LIKE_JNP


# ---------------------------------------------------------------------------
# Kernel
# ---------------------------------------------------------------------------
def bottleneck_csp_kernel(x_ref, w1_ref, b1_ref, wm1_ref, bm1_ref, wm2_ref,
                          bm2_ref, w3_ref, w2_ref, sbn_ref, bbn_ref,
                          w4_ref, b4_ref, o_ref, *, c1, c_, c2, H, W,
                          roll_like_jnp):
    """BottleneckCSP forward for one batch chunk (spatial-in-lanes).

    Activations are Python lists of per-channel (Nb, H*W) f32 slabs (full
    128-lane occupancy, batch in sublanes).  BN of cv1 / m.cv1 / m.cv2 / cv4
    is pre-folded into (weight, bias) by the wrapper; the stand-alone BN over
    the channel concat is passed as (scale, bias) and applied per concat-half
    so no in-kernel concat is needed.  Weights/biases are SMEM scalars.
    """
    HW = H * W
    nb = x_ref.shape[0]
    pow2_w = (W & (W - 1)) == 0

    def tree_sum(terms):
        # balanced pairwise reduction (shorter dependency chains than serial)
        while len(terms) > 1:
            nxt = [terms[i] + terms[i + 1] for i in range(0, len(terms) - 1, 2)]
            if len(terms) % 2:
                nxt.append(terms[-1])
            terms = nxt
        return terms[0]

    def mix(chs, w_ref, cin, cout, b_ref=None):
        # 1x1 conv: out[co] = sum_ci w[ci, co] * chs[ci] (+ b[co]); weights
        # are read as SMEM scalars (row-major (cin, cout) flattening).
        outs = []
        for co in range(cout):
            acc = tree_sum([chs[ci] * w_ref[ci * cout + co] for ci in range(cin)])
            if b_ref is not None:
                acc = acc + b_ref[co]
            outs.append(acc)
        return outs

    # per-channel lane-dense views of x: (Nb, HW)
    xs = [x_ref[:, ci, :] for ci in range(c1)]

    # ---- cv1: 1x1 conv (+ folded BN) + LeakyReLU --------------------------
    z1 = [_leaky(v) for v in mix(xs, w1_ref, c1, c_, b1_ref)]

    # ---- m.cv1: 1x1 conv (+ folded BN) + LeakyReLU ------------------------
    a = [_leaky(v) for v in mix(z1, wm1_ref, c_, c_, bm1_ref)]

    # ---- m.cv2: 3x3 conv, padding=1 (+ folded BN), then shortcut add ------
    # Static edge masks (built once): tap (dy,dx) at flat position p is valid
    # iff p+off is inside the flattened image AND the column stays in [0, W).
    pos = lax.broadcasted_iota(jnp.int32, (nb, HW), 1)     # flat position
    col = (pos & (W - 1)) if pow2_w else (pos % W)

    def tap_mask(dy, dx):
        off = dy * W + dx
        flat_ok = jnp.logical_and(pos + off >= 0, pos + off < HW)
        col_ok = jnp.logical_and(col + dx >= 0, col + dx < W)
        return jnp.logical_and(flat_ok, col_ok).astype(jnp.float32)

    def w3x3(ky, kx, ci, co):                               # wm2[ky, kx, ci, co]
        return wm2_ref[((ky * 3 + kx) * c_ + ci) * c_ + co]

    # 2 partial accumulators per output channel (breaks the serial add chain)
    n_acc = 2
    parts = [[None] * n_acc for _ in range(c_)]

    def add_part(co, slot, term):
        parts[co][slot] = term if parts[co][slot] is None else parts[co][slot] + term

    # centre tap (no shift, no mask)
    for ci in range(c_):
        for co in range(c_):
            add_part(co, (ci + co) % n_acc, a[ci] * w3x3(1, 1, ci, co))

    # 8 neighbour taps: single-direction lane rotation + one static-mask mul
    tap = 0
    for dy in (-1, 0, 1):
        for dx in (-1, 0, 1):
            if dy == 0 and dx == 0:
                continue
            off = dy * W + dx
            # shift chosen so rolled[p] == a[(p + off) mod HW]
            shift = ((-off) % HW) if roll_like_jnp else (off % HW)
            m = tap_mask(dy, dx)
            for ci in range(c_):
                rm = pltpu.roll(a[ci], shift, axis=1) * m
                for co in range(c_):
                    add_part(co, (tap + ci + co) % n_acc,
                             rm * w3x3(dy + 1, dx + 1, ci, co))
            tap += 1

    acc3 = [tree_sum([t for t in parts[co] if t is not None]) for co in range(c_)]

    # shortcut: Bottleneck(c_, c_, shortcut=True, e=1.0)
    zm = [z1[co] + _leaky(acc3[co] + bm2_ref[co]) for co in range(c_)]

    # ---- y1 = cv3(m(cv1(x))),  y2 = cv2(x)  (plain 1x1, no bias, no BN) ---
    y1 = mix(zm, w3_ref, c_, c_)
    y2 = mix(xs, w2_ref, c1, c_)

    # ---- BN over cat([y1, y2], channel) + LeakyReLU, applied per half -----
    t = ([_leaky(y1[c] * sbn_ref[c] + bbn_ref[c]) for c in range(c_)]
         + [_leaky(y2[c] * sbn_ref[c_ + c] + bbn_ref[c_ + c]) for c in range(c_)])

    # ---- cv4: 1x1 conv over 2*c_ channels (+ folded BN) + LeakyReLU -------
    out = mix(t, w4_ref, 2 * c_, c2, b4_ref)
    for co in range(c2):
        o_ref[:, co, :] = _leaky(out[co])       # lane-dense (HW mult. of 128)


# ---------------------------------------------------------------------------
# Wrapper
# ---------------------------------------------------------------------------
def _fold_bn(gamma, beta, mean, var):
    s = gamma / jnp.sqrt(var + EPS)
    return s, beta - mean * s


def _batch_block(n):
    # Largest divisor of n that is <= 8 (sublane depth of one f32 vreg).
    # NOTE(v7x): when N/nb >= 2 the parallel grid axis also feeds both
    # TensorCores; for tiny N we prioritise sublane occupancy (wins on all
    # generations) over the 2-way core split.
    for nb in range(min(n, 8), 0, -1):
        if n % nb == 0:
            return nb
    return 1


def bottleneck_csp(x_nchw, params):
    """Wrapper: NCHW in / NCHW out; BN folded; weights as flat SMEM scalars."""
    N, c1, H, W = x_nchw.shape
    c_ = params['w1'].shape[1]
    c2 = params['w4'].shape[1]
    HW = H * W

    # NCHW -> (N, C, H*W) is a pure reshape (no transpose / relayout).
    x = x_nchw.reshape(N, c1, HW).astype(jnp.float32)

    s1, b1 = _fold_bn(*params['bn1'])
    w1f = (params['w1'] * s1[None, :]).reshape(-1)
    sm1, bm1 = _fold_bn(*params['bnm1'])
    wm1f = (params['wm1'] * sm1[None, :]).reshape(-1)
    sm2, bm2 = _fold_bn(*params['bnm2'])
    wm2f = (params['wm2'] * sm2[None, None, None, :]).reshape(-1)
    sbn, bbn = _fold_bn(*params['bncat'])
    s4, b4 = _fold_bn(*params['bn4'])
    w4f = (params['w4'] * s4[None, :]).reshape(-1)

    smem_args = (w1f, b1, wm1f, bm1, wm2f, bm2,
                 params['w3'].reshape(-1), params['w2'].reshape(-1),
                 sbn, bbn, w4f, b4)

    nb = _batch_block(N)
    kernel = functools.partial(bottleneck_csp_kernel,
                               c1=c1, c_=c_, c2=c2, H=H, W=W,
                               roll_like_jnp=_roll_matches_jnp())
    smem_spec = pl.BlockSpec(memory_space=pltpu.MemorySpace.SMEM)

    out = pl.pallas_call(
        kernel,
        out_shape=jax.ShapeDtypeStruct((N, c2, HW), jnp.float32),
        grid=(N // nb,),
        in_specs=[pl.BlockSpec((nb, c1, HW), lambda n: (n, 0, 0))]
                 + [smem_spec] * len(smem_args),
        out_specs=pl.BlockSpec((nb, c2, HW), lambda n: (n, 0, 0)),
        compiler_params=pltpu.CompilerParams(
            dimension_semantics=("parallel",)),
    )(x, *smem_args)
    return out.reshape(N, c2, H, W)


# ------------------------- pure-JAX reference ------------------------------
def reference(x_nchw, params):
    x = jnp.transpose(x_nchw, (0, 2, 3, 1)).astype(jnp.float32)

    def conv(t, w, pad):
        if w.ndim == 2:
            w = w[None, None]                       # (1,1,Cin,Cout)
        return lax.conv_general_dilated(
            t, w, window_strides=(1, 1), padding=pad,
            dimension_numbers=('NHWC', 'HWIO', 'NHWC'))

    def bn(t, p):
        gamma, beta, mean, var = p
        return (t - mean) / jnp.sqrt(var + EPS) * gamma + beta

    def lk(t):
        return jnp.where(t > 0, t, LEAKY * t)

    z1 = lk(bn(conv(x, params['w1'], 'VALID'), params['bn1']))
    a = lk(bn(conv(z1, params['wm1'], 'VALID'), params['bnm1']))
    b = lk(bn(conv(a, params['wm2'], 'SAME'), params['bnm2']))
    zm = z1 + b
    y1 = conv(zm, params['w3'], 'VALID')
    y2 = conv(x, params['w2'], 'VALID')
    t = lk(bn(jnp.concatenate([y1, y2], axis=-1), params['bncat']))
    out = lk(bn(conv(t, params['w4'], 'VALID'), params['bn4']))
    return jnp.transpose(out, (0, 3, 1, 2))


# ------------------------- deterministic params ----------------------------
def init_params(key, c1, c2, e=0.5):
    c_ = int(c2 * e)
    ks = jax.random.split(key, 11)

    def w(k, shape):
        return 0.1 * jax.random.normal(k, shape, jnp.float32)

    def bn(k, c):
        k1, k2, k3, k4 = jax.random.split(k, 4)
        gamma = 1.0 + 0.1 * jax.random.normal(k1, (c,), jnp.float32)
        beta = 0.1 * jax.random.normal(k2, (c,), jnp.float32)
        mean = 0.1 * jax.random.normal(k3, (c,), jnp.float32)
        var = 0.5 + jax.random.uniform(k4, (c,), jnp.float32)
        return (gamma, beta, mean, var)

    return {
        'w1': w(ks[0], (c1, c_)),          'bn1': bn(ks[1], c_),     # cv1
        'wm1': w(ks[2], (c_, c_)),         'bnm1': bn(ks[3], c_),    # m.cv1
        'wm2': w(ks[4], (3, 3, c_, c_)),   'bnm2': bn(ks[5], c_),    # m.cv2 (3x3)
        'w3': w(ks[6], (c_, c_)),                                    # cv3 (no BN)
        'w2': w(ks[7], (c1, c_)),                                    # cv2 (no BN)
        'bncat': bn(ks[8], 2 * c_),                                  # self.bn
        'w4': w(ks[9], (2 * c_, c2)),      'bn4': bn(ks[10], c2),    # cv4
    }


if __name__ == "__main__":
    key = jax.random.PRNGKey(0)
    kx, kp = jax.random.split(key)
    c1 = c2 = 4
    x = jax.random.normal(kx, (2, c1, 16, 16), jnp.float32)   # NCHW, like PyTorch
    params = init_params(kp, c1, c2)

    out = bottleneck_csp(x, params)
    out = jax.block_until_ready(out)

    ref = reference(x, params)
    assert out.shape == ref.shape == (2, c2, 16, 16)
    err = float(jnp.max(jnp.abs(out - ref)))
    assert jnp.allclose(out, ref, atol=1e-4, rtol=1e-4), f"max abs err = {err}"
    print("KERNEL_OK")
</pallas_src>

<mosaic_0001>
module attributes {stable_mosaic.version = 11 : i64} {
  func.func @probe(%arg0: memref<2x256xi32, #tpu.memory_space<vmem>>, %arg1: memref<2x256xi32, #tpu.memory_space<vmem>>) attributes {dimension_semantics = [], scalar_prefetch = 0 : i64, scratch_operands = 0 : i64, tpu.core_type = #tpu.core_type<tc>} {
    %c0 = arith.constant 0 : index
    %c0_0 = arith.constant 0 : index
    %0 = vector.load %arg0[%c0, %c0_0] : memref<2x256xi32, #tpu.memory_space<vmem>>, vector<2x256xi32>
    %c1_i32 = arith.constant 1 : i32
    %1 = tpu.dynamic_rotate %0 by %c1_i32 dim 1 : vector<2x256xi32>, i32 -> vector<2x256xi32>
    %c0_1 = arith.constant 0 : index
    %c0_2 = arith.constant 0 : index
    %2 = vector.load %arg1[%c0_1, %c0_2] : memref<2x256xi32, #tpu.memory_space<vmem>>, vector<2x256xi32>
    tpu.vector_store %arg1[%c0_1, %c0_2], %1 {strides = array<i32>} : memref<2x256xi32, #tpu.memory_space<vmem>>, vector<2x256xi32>,
    return
  }
}

</mosaic_0001>

<llo_original>
// kernel: tpu_custom_call.1
$region0: #{tpu_custom_call.1}
  #allocation0 [shape = 'u32[]', space=smem, size = 0x4, offset = 0x4, fixed_abs, tag = 'smem constant byte address 0x4 - core index']
  #allocation1 [shape = 'u32[144,128]{1,0:T(1,128)}', space=vmem, size = 0x12000, scoped, tag = 'internal scratch']
  %s0 = inlined_call_operand.hbm [shape: s32[2,256], index: 0, kind: input, shape index: {}]
  %s1 = inlined_call_operand.hbm [shape: s32[2,256], index: 1, kind: output, shape index: {}]
  %s2 = sld [smem:[#allocation0]]
  $region18: #{tpu_custom_call.1} parent=0
    _
  %s4 = ssub.s32 1, %s2
  %s5 = scalar_select 0, %s4, %s2
  $region1: #{tpu_custom_call.1} parent=0
    #allocation2 [shape = 'u8[2048]{0}', space=vmem, size = 0x800, scoped, tag = 'input window, operand 0, single buffered']
    #allocation3 [shape = 's32[1]{0}', space=sflag, size = 0x4, scoped, tag = 'scoped memory for tpu_custom_call.1']
    #allocation4 [shape = 's32[1]{0}', space=sflag, size = 0x4, scoped, tag = 'scoped memory for tpu_custom_call.1']
    #allocation5 [shape = 'u8[2048]{0}', space=vmem, size = 0x800, scoped, tag = 'output window, operand 0, single buffered']
    %6 = vsyncpa [#allocation3], 0
    %7 = vsyncpa [#allocation4], 0
    // Predicated region
    $region2: #{tpu_custom_call.1} parent=1 // pred_check
      _
    $region3: #{tpu_custom_call.1} parent=1 // pred_check_branch
      %9 = sbr.rel (0) target = $region5
    $region4: #{tpu_custom_call.1} parent=1 // pred_region
      %s11 = ssub.s32 64, 64
      %12 = vsyncadd [#allocation3], %s11
      %s14 = sshll.u32 [#allocation2], 4
      %s15 = int_to_ptr.vmem [resolvable:$true] %s14
      %17 = dma.hbm_to_vmem [thread:$0]  %s0, 64, %s15, [#allocation3]
    $region5: #{tpu_custom_call.1} parent=1 // pred_fallthru
      _
    // Predicated region
    $region6: #{tpu_custom_call.1} parent=1 // pred_check
      _
    $region7: #{tpu_custom_call.1} parent=1 // pred_check_branch
      %19 = sbr.rel (0) target = $region9
    $region8: #{tpu_custom_call.1} parent=1 // pred_region
      %20 = dma.done [#allocation3], 64
    $region9: #{tpu_custom_call.1} parent=1 // pred_fallthru
      _
    %v21 = vld [vmem:[#allocation2] sm:$0xf]
    %v23 = vunpack.c.l.s4 1983009808
    %v24 = vunpack.c.0.s8 %v23
    %v25 = vlaneseq
    %v26 = vshrl.u32 %v25, 7
    %v27 = vsub.s32 %v24, %v26
    %v28 = vrot.slane %v21, %v27
    %v29 = vcombine.high %v28, %v28
    %30 = vrot.lane.b32.xlu0 %v28, 1
    %v31 = vpop.permute.xlu0 %30
    %32 = vrot.lane.b32.xlu0 %v29, 1
    %v33 = vpop.permute.xlu0 %32
    %v34 = vlaneseq
    %v35 = vand.u32 %v34, 127
    %vm36 = vcmp.lt.s32.totalorder %v35, 1
    %v37 = vsel %vm36, %v31, %v33
    %v38 = vsel %vm36, %v33, %v31
    %v39 = vcombine.low %v38, %v37
    %v41 = vunpack.c.l.s4 1983009808
    %v42 = vunpack.c.0.s8 %v41
    %v43 = vlaneseq
    %v44 = vshrl.u32 %v43, 7
    %v45 = vsub.s32 %v42, %v44
    %v46 = vrot.slane %v39, %v45
    %47 = vst [vmem:[#allocation5] sm:$0xf] %v46
    // Predicated region
    $region10: #{tpu_custom_call.1} parent=1 // pred_check
      _
    $region11: #{tpu_custom_call.1} parent=1 // pred_check_branch
      %49 = sbr.rel (0) target = $region13
    $region12: #{tpu_custom_call.1} parent=1 // pred_region
      %s51 = ssub.s32 64, 64
      %52 = vsyncadd [#allocation4], %s51
      %s54 = sshll.u32 [#allocation5], 4
      %s55 = int_to_ptr.vmem [resolvable:$true] %s54
      %57 = dma.vmem_to_hbm [thread:$0]  %s55, 64, %s1, [#allocation4]
    $region13: #{tpu_custom_call.1} parent=1 // pred_fallthru
      _
    // Predicated region
    $region14: #{tpu_custom_call.1} parent=1 // pred_check
      _
    $region15: #{tpu_custom_call.1} parent=1 // pred_check_branch
      %59 = sbr.rel (0) target = $region17
    $region16: #{tpu_custom_call.1} parent=1 // pred_region
      %60 = dma.done [#allocation4], 64
    $region17: #{tpu_custom_call.1} parent=1 // pred_fallthru
      _
    %61 = vsyncpa [#allocation3], 1
    %62 = vsyncpa [#allocation4], 1

</llo_original>
